<compile_context>
chip_gen: v7x
topology: tpu7x:2x2x1
jax: 0.10.0
libtpu: 0.0.40
codegen_flags: <defaults>
</compile_context>

<pallas_src>
import functools

import jax
import jax.numpy as jnp
from jax.experimental import pallas as pl
from jax.experimental.pallas import tpu as pltpu


def _layernorm_kernel(x_ref, w_ref, b_ref, o_ref, *, eps, hidden):
    # x_ref: (rows_tile, hidden_pad); zero-padded lanes contribute 0 to both
    # sums, so dividing by the true `hidden` gives the correct mean/variance.
    x = x_ref[...].astype(jnp.float32)
    inv_h = 1.0 / float(hidden)
    s1 = jnp.sum(x, axis=-1, keepdims=True)           # sum(x)
    s2 = jnp.sum(x * x, axis=-1, keepdims=True)       # sum(x^2)
    mean = s1 * inv_h
    var = jnp.maximum(s2 * inv_h - mean * mean, 0.0)  # biased variance
    inv = jax.lax.rsqrt(var + eps)
    y = (x - mean) * inv
    w = w_ref[...].astype(jnp.float32)                # (1, hidden_pad)
    b = b_ref[...].astype(jnp.float32)                # (1, hidden_pad)
    o_ref[...] = (w * y + b).astype(o_ref.dtype)


def bert_layer_norm(x, weight, bias, eps=1e-12, rows_tile=None,
                    vmem_budget_bytes=12 * 1024 * 1024):
    orig_shape = x.shape
    hidden = orig_shape[-1]
    x2 = x.reshape(-1, hidden)
    rows = x2.shape[0]

    # --- Pad hidden to a multiple of 128 (lane-dense loads/stores). ---------
    hidden_pad = ((hidden + 127) // 128) * 128
    w2 = weight.reshape(1, hidden)
    b2 = bias.reshape(1, hidden)
    if hidden_pad != hidden:
        pad_h = hidden_pad - hidden
        x2 = jnp.pad(x2, ((0, 0), (0, pad_h)))
        w2 = jnp.pad(w2, ((0, 0), (0, pad_h)))
        b2 = jnp.pad(b2, ((0, 0), (0, pad_h)))

    # --- Pick the largest row tile that fits the scoped-VMEM budget. -------
    # Per element: 2x double-buffered input + 2x double-buffered output at the
    # I/O dtype, plus ~2 f32 intermediates inside the body.
    itemsize = jnp.dtype(x.dtype).itemsize
    if rows_tile is None:
        bytes_per_row = hidden_pad * (4 * itemsize + 8)
        rows_tile = (vmem_budget_bytes // bytes_per_row) // 8 * 8
        rows_tile = max(8, min(1024, rows_tile))
        # Don't over-tile tiny inputs.
        rows_tile = min(rows_tile, ((rows + 7) // 8) * 8)

    # --- Pad rows up to a multiple of rows_tile (sliced off afterwards). ---
    rows_padded = ((rows + rows_tile - 1) // rows_tile) * rows_tile
    if rows_padded != rows:
        x2 = jnp.pad(x2, ((0, rows_padded - rows), (0, 0)))

    grid = (rows_padded // rows_tile,)
    kernel = functools.partial(_layernorm_kernel, eps=eps, hidden=hidden)

    out = pl.pallas_call(
        kernel,
        out_shape=jax.ShapeDtypeStruct((rows_padded, hidden_pad), x.dtype),
        grid_spec=pltpu.PrefetchScalarGridSpec(
            num_scalar_prefetch=0,
            grid=grid,
            in_specs=[
                pl.BlockSpec((rows_tile, hidden_pad), lambda i: (i, 0)),
                # Constant block index -> Pallas skips re-DMA of weight/bias.
                pl.BlockSpec((1, hidden_pad), lambda i: (0, 0)),
                pl.BlockSpec((1, hidden_pad), lambda i: (0, 0)),
            ],
            out_specs=pl.BlockSpec((rows_tile, hidden_pad), lambda i: (i, 0)),
        ),
        compiler_params=pltpu.CompilerParams(
            dimension_semantics=("parallel",),
        ),
    )(x2, w2, b2)

    out = out[:rows, :hidden]
    return out.reshape(orig_shape)


def _reference(x, weight, bias, eps):
    u = jnp.mean(x, axis=-1, keepdims=True)
    s = jnp.mean((x - u) ** 2, axis=-1, keepdims=True)
    return weight * ((x - u) / jnp.sqrt(s + eps)) + bias


if __name__ == "__main__":
    key = jax.random.PRNGKey(0)

    # Small test consistent with the module: (batch, seq, hidden).
    batch, seq, hidden = 2, 8, 32
    x = jax.random.normal(key, (batch, seq, hidden), dtype=jnp.float32)
    weight = jnp.ones((hidden,), dtype=jnp.float32)   # PyTorch init: ones
    bias = jnp.zeros((hidden,), dtype=jnp.float32)    # PyTorch init: zeros

    y = bert_layer_norm(x, weight, bias, eps=1e-12)
    jax.block_until_ready(y)
    ref = _reference(x, weight, bias, 1e-12)
    assert y.shape == x.shape
    assert jnp.allclose(y, ref, atol=1e-5, rtol=1e-5)

    # Second check: odd row count + hidden not a multiple of 128 + non-trivial
    # weight/bias, exercising the padding/slicing paths.
    k1, k2, k3, k4 = jax.random.split(key, 4)
    batch2, seq2, hidden2 = 3, 5, 96
    x2 = jax.random.normal(k1, (batch2, seq2, hidden2), dtype=jnp.float32)
    w2 = 1.0 + 0.1 * jax.random.normal(k2, (hidden2,), dtype=jnp.float32)
    b2 = 0.1 * jax.random.normal(k3, (hidden2,), dtype=jnp.float32)
    y2 = bert_layer_norm(x2, w2, b2, eps=1e-12)
    jax.block_until_ready(y2)
    ref2 = _reference(x2, w2, b2, 1e-12)
    assert y2.shape == x2.shape
    assert jnp.allclose(y2, ref2, atol=1e-5, rtol=1e-5)

    print("KERNEL_OK")
</pallas_src>

<mosaic_0001>
module attributes {stable_mosaic.version = 11 : i64} {
  func.func @_layernorm_kernel(%arg0: i32, %arg1: memref<16x128xf32, #tpu.memory_space<vmem>>, %arg2: memref<1x128xf32, #tpu.memory_space<vmem>>, %arg3: memref<1x128xf32, #tpu.memory_space<vmem>>, %arg4: memref<16x128xf32, #tpu.memory_space<vmem>>) attributes {dimension_semantics = [#tpu.dimension_semantics<parallel>], iteration_bounds = array<i64: 1>, scalar_prefetch = 0 : i64, scratch_operands = 0 : i64, tpu.core_type = #tpu.core_type<tc>, window_params = [{transform_indices = @transform_0, window_bounds = array<i64: 16, 128>}, {pipeline_mode = #tpu.pipeline_mode<synchronous>, transform_indices = @transform_1, window_bounds = array<i64: 1, 128>}, {pipeline_mode = #tpu.pipeline_mode<synchronous>, transform_indices = @transform_2, window_bounds = array<i64: 1, 128>}, {transform_indices = @transform_3, window_bounds = array<i64: 16, 128>}]} {
    %c0 = arith.constant 0 : index
    %c0_0 = arith.constant 0 : index
    %0 = vector.load %arg1[%c0, %c0_0] : memref<16x128xf32, #tpu.memory_space<vmem>>, vector<16x128xf32>
    %cst = arith.constant dense<0.000000e+00> : vector<16xf32>
    %1 = vector.multi_reduction <add>, %0, %cst [1] : vector<16x128xf32> to vector<16xf32>
    %2 = vector.shape_cast %1 : vector<16xf32> to vector<16x1xf32>
    %3 = arith.mulf %0, %0 : vector<16x128xf32>
    %cst_1 = arith.constant dense<0.000000e+00> : vector<16xf32>
    %4 = vector.multi_reduction <add>, %3, %cst_1 [1] : vector<16x128xf32> to vector<16xf32>
    %5 = vector.shape_cast %4 : vector<16xf32> to vector<16x1xf32>
    %cst_2 = arith.constant 3.125000e-02 : f32
    %6 = vector.broadcast %cst_2 : f32 to vector<16x1xf32>
    %7 = arith.mulf %2, %6 : vector<16x1xf32>
    %cst_3 = arith.constant 3.125000e-02 : f32
    %8 = vector.broadcast %cst_3 : f32 to vector<16x1xf32>
    %9 = arith.mulf %5, %8 : vector<16x1xf32>
    %10 = arith.mulf %7, %7 : vector<16x1xf32>
    %11 = arith.subf %9, %10 : vector<16x1xf32>
    %cst_4 = arith.constant 0.000000e+00 : f32
    %12 = vector.broadcast %cst_4 : f32 to vector<16x1xf32>
    %13 = arith.maximumf %11, %12 : vector<16x1xf32>
    %cst_5 = arith.constant 9.99999996E-13 : f32
    %14 = vector.broadcast %cst_5 : f32 to vector<16x1xf32>
    %15 = arith.addf %13, %14 : vector<16x1xf32>
    %16 = math.rsqrt %15 : vector<16x1xf32>
    %17 = vector.broadcast %7 : vector<16x1xf32> to vector<16x128xf32>
    %18 = arith.subf %0, %17 : vector<16x128xf32>
    %19 = vector.broadcast %16 : vector<16x1xf32> to vector<16x128xf32>
    %20 = arith.mulf %18, %19 : vector<16x128xf32>
    %c0_6 = arith.constant 0 : index
    %c0_7 = arith.constant 0 : index
    %21 = vector.load %arg2[%c0_6, %c0_7] : memref<1x128xf32, #tpu.memory_space<vmem>>, vector<1x128xf32>
    %c0_8 = arith.constant 0 : index
    %c0_9 = arith.constant 0 : index
    %22 = vector.load %arg3[%c0_8, %c0_9] : memref<1x128xf32, #tpu.memory_space<vmem>>, vector<1x128xf32>
    %23 = vector.broadcast %21 : vector<1x128xf32> to vector<16x128xf32>
    %24 = arith.mulf %23, %20 : vector<16x128xf32>
    %25 = vector.broadcast %22 : vector<1x128xf32> to vector<16x128xf32>
    %26 = arith.addf %24, %25 : vector<16x128xf32>
    %c0_10 = arith.constant 0 : index
    %c0_11 = arith.constant 0 : index
    %27 = vector.load %arg4[%c0_10, %c0_11] : memref<16x128xf32, #tpu.memory_space<vmem>>, vector<16x128xf32>
    tpu.vector_store %arg4[%c0_10, %c0_11], %26 {strides = array<i32>} : memref<16x128xf32, #tpu.memory_space<vmem>>, vector<16x128xf32>,
    return
  }
  func.func @transform_0(%arg0: i32) -> (i32, i32) {
    %c0_i32 = arith.constant 0 : i32
    %c0_i32_0 = arith.constant 0 : i32
    return %arg0, %c0_i32 : i32, i32
  }
  func.func @transform_1(%arg0: i32) -> (i32, i32) {
    %c0_i32 = arith.constant 0 : i32
    %c0_i32_0 = arith.constant 0 : i32
    %c0_i32_1 = arith.constant 0 : i32
    return %c0_i32, %c0_i32_0 : i32, i32
  }
  func.func @transform_2(%arg0: i32) -> (i32, i32) {
    %c0_i32 = arith.constant 0 : i32
    %c0_i32_0 = arith.constant 0 : i32
    %c0_i32_1 = arith.constant 0 : i32
    return %c0_i32, %c0_i32_0 : i32, i32
  }
  func.func @transform_3(%arg0: i32) -> (i32, i32) {
    %c0_i32 = arith.constant 0 : i32
    %c0_i32_0 = arith.constant 0 : i32
    return %arg0, %c0_i32 : i32, i32
  }
}

</mosaic_0001>

<llo_original>
// kernel: tpu_custom_call.1
$region0: #{tpu_custom_call.1}
  #allocation0 [shape = 'u32[]', space=smem, size = 0x4, offset = 0x4, fixed_abs, tag = 'smem constant byte address 0x4 - core index']
  #allocation1 [shape = 'u32[144,128]{1,0:T(1,128)}', space=vmem, size = 0x12000, scoped, tag = 'internal scratch']
  %s0 = inlined_call_operand.hbm [shape: f32[16,128], index: 0, kind: input, shape index: {}]
  %s1 = inlined_call_operand.vmem [shape: f32[1,128], index: 1, kind: input, shape index: {}]
  %s2 = inlined_call_operand.vmem [shape: f32[1,128], index: 2, kind: input, shape index: {}]
  %s3 = inlined_call_operand.hbm [shape: f32[16,128], index: 3, kind: output, shape index: {}]
  %s4 = sld [smem:[#allocation0]]
  $region26: #{tpu_custom_call.1} parent=0
    _
  %s6 = ssub.s32 1, %s4
  %s7 = scalar_select 0, %s6, %s4
  $region1: #{tpu_custom_call.1} parent=0
    #allocation2 [shape = 'u8[8192]{0}', space=vmem, size = 0x2000, scoped, tag = 'input window, operand 0, single buffered']
    #allocation3 [shape = 's32[1]{0}', space=sflag, size = 0x4, scoped, tag = 'scoped memory for tpu_custom_call.1']
    #allocation4 [shape = 's32[1]{0}', space=sflag, size = 0x4, scoped, tag = 'scoped memory for tpu_custom_call.1']
    #allocation5 [shape = 'u8[8192]{0}', space=vmem, size = 0x2000, scoped, tag = 'output window, operand 0, single buffered']
    %8 = vsyncpa [#allocation3], 0
    %9 = vsyncpa [#allocation4], 0
    // Predicated region
    $region2: #{tpu_custom_call.1} parent=1 // pred_check
      _
    $region3: #{tpu_custom_call.1} parent=1 // pred_check_branch
      %11 = sbr.rel (0) target = $region5
    $region4: #{tpu_custom_call.1} parent=1 // pred_region
      %s13 = ssub.s32 256, 256
      %14 = vsyncadd [#allocation3], %s13
      %s15 = sshll.u32 [#allocation2], 4
      %s16 = int_to_ptr.vmem [resolvable:$true] %s15
      %21 = dma.hbm_to_vmem [thread:$0]  %s0, 256, %s16, [#allocation3], 128, 128, 8
    $region5: #{tpu_custom_call.1} parent=1 // pred_fallthru
      _
    // Predicated region
    $region6: #{tpu_custom_call.1} parent=1 // pred_check
      _
    $region7: #{tpu_custom_call.1} parent=1 // pred_check_branch
      %23 = sbr.rel (0) target = $region9
    $region8: #{tpu_custom_call.1} parent=1 // pred_region
      _
    $region9: #{tpu_custom_call.1} parent=1 // pred_fallthru
      _
    // Predicated region
    $region10: #{tpu_custom_call.1} parent=1 // pred_check
      _
    $region11: #{tpu_custom_call.1} parent=1 // pred_check_branch
      %25 = sbr.rel (0) target = $region13
    $region12: #{tpu_custom_call.1} parent=1 // pred_region
      _
    $region13: #{tpu_custom_call.1} parent=1 // pred_fallthru
      _
    // Predicated region
    $region14: #{tpu_custom_call.1} parent=1 // pred_check
      _
    $region15: #{tpu_custom_call.1} parent=1 // pred_check_branch
      %27 = sbr.rel (0) target = $region17
    $region16: #{tpu_custom_call.1} parent=1 // pred_region
      %28 = dma.done [#allocation3], 256
    $region17: #{tpu_custom_call.1} parent=1 // pred_fallthru
      _
    %v29 = vld [vmem:[#allocation2] sm:$0xff]
    %v30 = vld [vmem:[#allocation2 + $0x8] sm:$0xff]
    %31 = vadd.xlane.f32.xlu0 %v29
    %v32 = vpop.xlane.xlu0 %31
    %33 = vadd.xlane.f32.xlu0 %v30
    %v34 = vpop.xlane.xlu0 %33
    %v35 = vmul.f32 %v29, %v29
    %v36 = vmul.f32 %v30, %v30
    %37 = vadd.xlane.f32.xlu0 %v35
    %v38 = vpop.xlane.xlu0 %37
    %39 = vadd.xlane.f32.xlu0 %v36
    %v40 = vpop.xlane.xlu0 %39
    %v41 = vmul.f32 %v32, 0.03125
    %v42 = vmul.f32 %v34, 0.03125
    %v43 = vmul.f32 %v38, 0.03125
    %v44 = vmul.f32 %v40, 0.03125
    %v45 = vmul.f32 %v41, %v41
    %v46 = vmul.f32 %v42, %v42
    %v47 = vsub.f32 %v43, %v45
    %v48 = vsub.f32 %v44, %v46
    %v49 = vmax.f32 %v47, 0.0
    %v50 = vmax.f32 %v48, 0.0
    %v51 = vadd.f32 %v49, 1e-12
    %v52 = vadd.f32 %v50, 1e-12
    %v53 = vrsqrt.pop %v51
    %v54 = vrsqrt.pop %v52
    %v55 = vsub.f32 %v29, %v41
    %v56 = vsub.f32 %v30, %v42
    %v57 = vmul.f32 %v55, %v53
    %v58 = vmul.f32 %v56, %v54
    %v59 = vld [vmem:[%s1] sm:$0x1]
    %v60 = vld [vmem:[%s2] sm:$0x1]
    %v62 = vlaneseq
    %v63 = vshrl.u32 %v62, 7
    %v64 = vsub.s32 0, %v63
    %v65 = vrot.slane %v59, %v64
    %v67 = vmul.f32 %v65, %v57
    %v68 = vmul.f32 %v65, %v58
    %v70 = vlaneseq
    %v71 = vshrl.u32 %v70, 7
    %v72 = vsub.s32 0, %v71
    %v73 = vrot.slane %v60, %v72
    %v75 = vadd.f32 %v67, %v73
    %v76 = vadd.f32 %v68, %v73
    %77 = vst [vmem:[#allocation5] sm:$0xff] %v75
    %78 = vst [vmem:[#allocation5 + $0x8] sm:$0xff] %v76
    // Predicated region
    $region18: #{tpu_custom_call.1} parent=1 // pred_check
      _
    $region19: #{tpu_custom_call.1} parent=1 // pred_check_branch
      %80 = sbr.rel (0) target = $region21
    $region20: #{tpu_custom_call.1} parent=1 // pred_region
      %s82 = ssub.s32 256, 256
      %83 = vsyncadd [#allocation4], %s82
      %s84 = sshll.u32 [#allocation5], 4
      %s85 = int_to_ptr.vmem [resolvable:$true] %s84
      %90 = dma.vmem_to_hbm [thread:$0]  %s85, 256, %s3, [#allocation4], 128, 128, 8
    $region21: #{tpu_custom_call.1} parent=1 // pred_fallthru
      _
    // Predicated region
    $region22: #{tpu_custom_call.1} parent=1 // pred_check
      _
    $region23: #{tpu_custom_call.1} parent=1 // pred_check_branch
      %92 = sbr.rel (0) target = $region25
    $region24: #{tpu_custom_call.1} parent=1 // pred_region
      %93 = dma.done [#allocation4], 256
    $region25: #{tpu_custom_call.1} parent=1 // pred_fallthru
      _
    %94 = vsyncpa [#allocation3], 1
    %95 = vsyncpa [#allocation4], 1

</llo_original>
